<compile_context>
chip_gen: v7x
topology: tpu7x:2x2x1
jax: 0.10.0
libtpu: 0.0.40
codegen_flags: <defaults>
</compile_context>

<pallas_src>
import jax
import jax.numpy as jnp
from jax.experimental import pallas as pl
from jax.experimental.pallas import tpu as pltpu

_LANES = 128        # vreg lane width; last dim of the lane-dense slab
_TILE_ROWS = 4096   # 4096 x 128 f32 = 2 MiB per block buffer
                    # -> ~8 MiB double-buffered (in + out), fits every
                    #    generation's scoped-VMEM budget.


def _linear_kernel(w_ref, b_ref, x_ref, o_ref):
    # w_ref / b_ref are (1, 1) f32 scalars in SMEM; x_ref / o_ref are
    # lane-dense (tile_r, 128) VMEM tiles in the caller's dtype.
    # One VPU FMA per vreg; the kernel is purely HBM-bandwidth bound.
    w = w_ref[0, 0]
    b = b_ref[0, 0]
    x = x_ref[...].astype(jnp.float32)      # no-op for f32; free for bf16
    o_ref[...] = (x * w + b).astype(o_ref.dtype)


def linear_regression_forward(x, w, b):
    """y = x @ W^T + b for W of shape (1, 1), b of shape (1,).

    x: [N, 1]
    returns: [N, 1] in x's dtype
    """
    n, f = x.shape
    assert f == 1, "linear_regression expects a single input feature"
    dtype = x.dtype

    if n == 0:  # guard: avoid a 0-sized block shape
        return jnp.zeros((0, 1), dtype)

    w2 = jnp.asarray(w, jnp.float32).reshape(1, 1)
    b2 = jnp.asarray(b, jnp.float32).reshape(1, 1)

    # ---- Lane-dense view -------------------------------------------------
    # Flatten and pad only to a 128-lane multiple (<= 127 extra elements).
    # When N % 128 == 0 this whole path is a zero-copy reshape: no pad on the
    # way in and no slice on the way out.
    xf = x.reshape(-1)
    pad = (-n) % _LANES
    if pad:
        xf = jnp.pad(xf, (0, pad))
    rows = (n + pad) // _LANES
    x2 = xf.reshape(rows, _LANES)

    # Tile: either the whole array (block == full dims, always legal) or a
    # 4096-row block (multiple of 8 sublanes).  Partial edge blocks are
    # handled by Pallas (masked writes), so no padding to a tile multiple.
    tile_r = min(_TILE_ROWS, rows)
    grid = (pl.cdiv(rows, tile_r),)

    elem_bytes = jnp.dtype(dtype).itemsize
    cost = pl.CostEstimate(
        flops=2 * rows * _LANES,
        transcendentals=0,
        bytes_accessed=2 * rows * _LANES * elem_bytes,
    )

    y2 = pl.pallas_call(
        _linear_kernel,
        out_shape=jax.ShapeDtypeStruct((rows, _LANES), dtype),
        grid_spec=pl.GridSpec(
            grid=grid,
            in_specs=[
                pl.BlockSpec(memory_space=pltpu.SMEM),              # weight scalar
                pl.BlockSpec(memory_space=pltpu.SMEM),              # bias scalar
                pl.BlockSpec((tile_r, _LANES), lambda i: (i, 0)),   # x tile
            ],
            out_specs=pl.BlockSpec((tile_r, _LANES), lambda i: (i, 0)),  # y tile
        ),
        compiler_params=pltpu.CompilerParams(
            # "parallel" lets v7x shard the grid across its two TensorCores;
            # harmless (near-zero effect) on single-TC v5e/v6e.
            dimension_semantics=("parallel",),
            vmem_limit_bytes=32 * 1024 * 1024,
        ),
        cost_estimate=cost,
    )(w2, b2, x2)

    # ---- Restore exact [N, 1] output --------------------------------------
    yf = y2.reshape(-1)
    if pad:
        yf = yf[:n]                 # only taken on the ragged (N % 128 != 0) path
    return yf.reshape(n, 1)


if __name__ == "__main__":
    key = jax.random.PRNGKey(0)
    kx, kw, kb, kx2 = jax.random.split(key, 4)

    # Deterministic parameter init mimicking nn.Linear(1, 1):
    # uniform(-1/sqrt(in_features), +1/sqrt(in_features)) with in_features = 1.
    w = jax.random.uniform(kw, (1, 1), jnp.float32, minval=-1.0, maxval=1.0)
    b = jax.random.uniform(kb, (1,), jnp.float32, minval=-1.0, maxval=1.0)

    # Small input batch consistent with the module's forward: [N, 1].
    x = jax.random.normal(kx, (8, 1), jnp.float32)
    y = jax.block_until_ready(linear_regression_forward(x, w, b))

    y_ref = x @ w.T + b
    assert y.shape == (8, 1)
    assert jnp.allclose(y, y_ref, atol=1e-6), "mismatch vs reference (small N)"

    # Larger ragged batch: exercises the multi-step grid (rows > tile_r), the
    # partial (masked) edge block, and the <128-element tail padding path.
    n_big = 600_005
    x_big = jax.random.normal(kx2, (n_big, 1), jnp.float32)
    y_big = jax.block_until_ready(linear_regression_forward(x_big, w, b))

    y_big_ref = x_big @ w.T + b
    assert y_big.shape == (n_big, 1)
    assert jnp.allclose(y_big, y_big_ref, atol=1e-6), "mismatch vs reference (large N)"

    # Aligned batch (N % 128 == 0): zero-copy reshape path (no pad, no slice).
    x_al = jax.random.normal(kx2, (4096 * 128, 1), jnp.float32)
    y_al = jax.block_until_ready(linear_regression_forward(x_al, w, b))
    assert jnp.allclose(y_al, x_al @ w.T + b, atol=1e-6), "mismatch (aligned N)"

    print("KERNEL_OK")
</pallas_src>

<mosaic_0001>
module attributes {stable_mosaic.version = 11 : i64} {
  func.func @_linear_kernel(%arg0: i32, %arg1: memref<1x1xf32, #tpu.memory_space<smem>>, %arg2: memref<1x1xf32, #tpu.memory_space<smem>>, %arg3: memref<1x128xf32, #tpu.memory_space<vmem>>, %arg4: memref<1x128xf32, #tpu.memory_space<vmem>>) attributes {dimension_semantics = [#tpu.dimension_semantics<parallel>], iteration_bounds = array<i64: 1>, scalar_prefetch = 0 : i64, scratch_operands = 0 : i64, tpu.core_type = #tpu.core_type<tc>, window_params = [{transform_indices = @transform_0, window_bounds = array<i64: 1, 1>}, {transform_indices = @transform_1, window_bounds = array<i64: 1, 1>}, {transform_indices = @transform_2, window_bounds = array<i64: 1, 128>}, {transform_indices = @transform_3, window_bounds = array<i64: 1, 128>}]} {
    %c0 = arith.constant 0 : index
    %c0_0 = arith.constant 0 : index
    %0 = memref.load %arg1[%c0, %c0_0] : memref<1x1xf32, #tpu.memory_space<smem>>
    %c0_1 = arith.constant 0 : index
    %c0_2 = arith.constant 0 : index
    %1 = memref.load %arg2[%c0_1, %c0_2] : memref<1x1xf32, #tpu.memory_space<smem>>
    %c0_3 = arith.constant 0 : index
    %c0_4 = arith.constant 0 : index
    %2 = vector.load %arg3[%c0_3, %c0_4] : memref<1x128xf32, #tpu.memory_space<vmem>>, vector<1x128xf32>
    %3 = vector.broadcast %0 : f32 to vector<1x128xf32>
    %4 = arith.mulf %2, %3 : vector<1x128xf32>
    %5 = vector.broadcast %1 : f32 to vector<1x128xf32>
    %6 = arith.addf %4, %5 : vector<1x128xf32>
    %c0_5 = arith.constant 0 : index
    %c0_6 = arith.constant 0 : index
    %7 = vector.load %arg4[%c0_5, %c0_6] : memref<1x128xf32, #tpu.memory_space<vmem>>, vector<1x128xf32>
    tpu.vector_store %arg4[%c0_5, %c0_6], %6 {strides = array<i32>} : memref<1x128xf32, #tpu.memory_space<vmem>>, vector<1x128xf32>,
    return
  }
  func.func @transform_0(%arg0: i32) -> (i32, i32) {
    %c0_i32 = arith.constant 0 : i32
    %c0_i32_0 = arith.constant 0 : i32
    %c0_i32_1 = arith.constant 0 : i32
    return %c0_i32, %c0_i32_0 : i32, i32
  }
  func.func @transform_1(%arg0: i32) -> (i32, i32) {
    %c0_i32 = arith.constant 0 : i32
    %c0_i32_0 = arith.constant 0 : i32
    %c0_i32_1 = arith.constant 0 : i32
    return %c0_i32, %c0_i32_0 : i32, i32
  }
  func.func @transform_2(%arg0: i32) -> (i32, i32) {
    %c0_i32 = arith.constant 0 : i32
    %c0_i32_0 = arith.constant 0 : i32
    return %arg0, %c0_i32 : i32, i32
  }
  func.func @transform_3(%arg0: i32) -> (i32, i32) {
    %c0_i32 = arith.constant 0 : i32
    %c0_i32_0 = arith.constant 0 : i32
    return %arg0, %c0_i32 : i32, i32
  }
}

</mosaic_0001>

<llo_original>
// kernel: tpu_custom_call.1
$region0: #{tpu_custom_call.1}
  #allocation0 [shape = 'u32[]', space=smem, size = 0x4, offset = 0x4, fixed_abs, tag = 'smem constant byte address 0x4 - core index']
  #allocation1 [shape = 'u32[144,128]{1,0:T(1,128)}', space=vmem, size = 0x12000, scoped, tag = 'internal scratch']
  #allocation2 [shape = 'f32[1,1]{1,0:T(1,128)S(6)}', space=smem, size = 0x200, scoped, tag = 'scoped memory for tpu_custom_call.1']
  #allocation3 [shape = 'f32[1,1]{1,0:T(1,128)S(6)}', space=smem, size = 0x200, scoped, tag = 'scoped memory for tpu_custom_call.1']
  %s0 = inlined_call_operand.<no memory space> [shape: f32[1,1], index: 0, kind: input, shape index: {}]
  %s1 = inlined_call_operand.<no memory space> [shape: f32[1,1], index: 1, kind: input, shape index: {}]
  %s2 = inlined_call_operand.vmem [shape: f32[1,128], index: 2, kind: input, shape index: {}]
  %s3 = inlined_call_operand.hbm [shape: f32[1,128], index: 3, kind: output, shape index: {}]
  %s4 = sld [smem:[#allocation0]]
  $region22: #{tpu_custom_call.1} parent=0
    _
  %s6 = ssub.s32 1, %s4
  %s7 = scalar_select 0, %s6, %s4
  %8 = sst [smem:[#allocation2]] %s0
  %9 = sst [smem:[#allocation3]] %s1
  $region1: #{tpu_custom_call.1} parent=0
    #allocation4 [shape = 'u8[512]{0}', space=vmem, size = 0x400, scoped, tag = 'output window, operand 0, single buffered']
    #allocation5 [shape = 's32[1]{0}', space=sflag, size = 0x4, scoped, tag = 'scoped memory for tpu_custom_call.1']
    %10 = vsyncpa [#allocation5], 0
    // Predicated region
    $region2: #{tpu_custom_call.1} parent=1 // pred_check
      _
    $region3: #{tpu_custom_call.1} parent=1 // pred_check_branch
      %12 = sbr.rel (0) target = $region5
    $region4: #{tpu_custom_call.1} parent=1 // pred_region
      _
    $region5: #{tpu_custom_call.1} parent=1 // pred_fallthru
      _
    // Predicated region
    $region6: #{tpu_custom_call.1} parent=1 // pred_check
      _
    $region7: #{tpu_custom_call.1} parent=1 // pred_check_branch
      %14 = sbr.rel (0) target = $region9
    $region8: #{tpu_custom_call.1} parent=1 // pred_region
      _
    $region9: #{tpu_custom_call.1} parent=1 // pred_fallthru
      _
    // Predicated region
    $region10: #{tpu_custom_call.1} parent=1 // pred_check
      _
    $region11: #{tpu_custom_call.1} parent=1 // pred_check_branch
      %16 = sbr.rel (0) target = $region13
    $region12: #{tpu_custom_call.1} parent=1 // pred_region
      _
    $region13: #{tpu_custom_call.1} parent=1 // pred_fallthru
      _
    %s17 = sld [smem:[#allocation2]]
    %s18 = sld [smem:[#allocation3]]
    %v19 = vld [vmem:[%s2] sm:$0x1]
    %v20 = vstv %s17
    %v21 = vmul.f32 %v19, %v20
    %v22 = vstv %s18
    %v23 = vadd.f32 %v21, %v22
    %24 = vst [vmem:[#allocation4] sm:$0x1] %v23
    // Predicated region
    $region14: #{tpu_custom_call.1} parent=1 // pred_check
      _
    $region15: #{tpu_custom_call.1} parent=1 // pred_check_branch
      %26 = sbr.rel (0) target = $region17
    $region16: #{tpu_custom_call.1} parent=1 // pred_region
      %s28 = ssub.s32 16, 16
      %29 = vsyncadd [#allocation5], %s28
      %s31 = sshll.u32 [#allocation4], 4
      %s32 = int_to_ptr.vmem [resolvable:$true] %s31
      %34 = dma.vmem_to_hbm [thread:$0]  %s32, 16, %s3, [#allocation5]
    $region17: #{tpu_custom_call.1} parent=1 // pred_fallthru
      _
    // Predicated region
    $region18: #{tpu_custom_call.1} parent=1 // pred_check
      _
    $region19: #{tpu_custom_call.1} parent=1 // pred_check_branch
      %36 = sbr.rel (0) target = $region21
    $region20: #{tpu_custom_call.1} parent=1 // pred_region
      %37 = dma.done [#allocation5], 16
    $region21: #{tpu_custom_call.1} parent=1 // pred_fallthru
      _
    %38 = vsyncpa [#allocation5], 1

</llo_original>
